<compile_context>
chip_gen: v6e
topology: v6e:2x2x1
jax: 0.10.0
libtpu: 0.0.40
codegen_flags: <defaults>
</compile_context>

<pallas_src>
import functools

import jax
import jax.numpy as jnp
from jax.experimental import pallas as pl
from jax.experimental.pallas import tpu as pltpu

N_MS = 4                      # number of multispectral bands in the volume
PAN_CH = N_MS                 # TODO(synk): MultispectralUtils layout assumed = [ms_0..ms_3, pan]
CONSTANT_SRF = (-0.40107638, 0.95721835, 0.21377654, 0.16151386)

_ACC_ROWS = 8                             # vreg sublane height: strip / accumulator rows
_TARGET_STEP_BYTES = 8 * 1024 * 1024      # combined (pan + recon-source) input bytes per grid step
_VMEM_LIMIT_BYTES = 48 * 1024 * 1024      # safe on every generation (v7x physical VMEM = 64 MiB)
_MAX_UNROLL_GROUPS = 8                    # fully unroll the strip loop up to this many strips


def _srf_weights(srf_from):
    if srf_from == "average":
        return tuple(1.0 / N_MS for _ in range(N_MS))
    return tuple(float(c) for c in CONSTANT_SRF)


# --------------------------------------------------------------------------------------
# Pallas kernel: fused (pan - pan_recon) and both TV sum-of-squares terms.
# The (TH, W) tile is consumed in 8-row strips so only a few vregs are live at once.
# --------------------------------------------------------------------------------------
def _tv_kernel(pan_ref, rec_ref, out_ref, prev_ref, *, srf, th, H, W, ragged):
    h_idx = pl.program_id(1)
    n_groups = th // _ACC_ROWS            # static

    @pl.when(h_idx == 0)
    def _():
        out_ref[...] = jnp.zeros(out_ref.shape, out_ref.dtype)     # new batch: reset partials
        prev_ref[...] = jnp.zeros(prev_ref.shape, prev_ref.dtype)  # and the carried boundary row

    rid8 = jax.lax.broadcasted_iota(jnp.int32, (_ACC_ROWS, W), 0)
    cid = jax.lax.broadcasted_iota(jnp.int32, (_ACC_ROWS, W), 1)

    def load_strip(g):
        r0 = g * _ACC_ROWS
        if not isinstance(r0, int):
            r0 = pl.multiple_of(r0, _ACC_ROWS)
        rows = pl.ds(r0, _ACC_ROWS)
        pan = pan_ref[rows, :].astype(jnp.float32)
        if srf is None:                   # 'estimate': recon is the pan channel of x_net
            rec = rec_ref[rows, :].astype(jnp.float32)
        else:                             # 'average'/'constant': fused SRF-weighted channel sum
            rec = srf[0] * rec_ref[0, rows, :].astype(jnp.float32)
            for k in range(1, len(srf)):
                rec = rec + srf[k] * rec_ref[k, rows, :].astype(jnp.float32)
        return pan - rec                  # (8, W) f32

    def body(g, carry):
        acc_w, acc_h, bacc, wcorr, prev_row = carry

        strip = load_strip(g)
        if ragged:
            # The padded last tile can extend past H; its extra rows hold unspecified data.
            # Zero them: zero rows then contribute exactly 0 to every term except one
            # spurious vertical pair, removed below.
            grow = h_idx * th + g * _ACC_ROWS + rid8
            strip = jnp.where(grow < H, strip, 0.0)

        # ---- width term: circular lane roll (XLU). The circular sum counts every
        # horizontal pair once (whichever direction the roll goes) plus the wrap pair
        # (col 0, col W-1); the wrap pair is removed via `wcorr`.
        wd = strip - pltpu.roll(strip, 1, axis=1)
        acc_w = acc_w + wd * wd
        wr = strip[:, 0:1] - strip[:, W - 1:W]                      # (8, 1) wrap pair
        wcorr = wcorr + wr * wr

        # ---- height term inside the strip: circular sublane roll (XLU); the wrap pair
        # (row 0, row 7) is removed through `bacc`.
        hd = strip - pltpu.roll(strip, 1, axis=0)
        acc_h = acc_h + hd * hd
        row0 = strip[0:1, :]
        row_last = strip[_ACC_ROWS - 1:_ACC_ROWS, :]
        hr = row_last - row0                                        # (1, W) wrap pair
        if ragged:
            # Zeroed-row trick leaves one spurious vertical pair (last valid row vs the
            # zeroed row below it) inside the strip that contains row H-1; remove it.
            spur = jnp.logical_and(grow == (H - 1), rid8 < (_ACC_ROWS - 1))
            acc_h = acc_h - jnp.where(spur, strip * strip, 0.0)

        # ---- vertical pair across the strip / row-tile boundary: previous strip's last
        # row vs this strip's first row (not defined for the very first strip of a batch).
        bd = prev_row - row0
        b_valid = jnp.logical_or(h_idx > 0, g > 0)
        if ragged:
            b_valid = jnp.logical_and(b_valid, (h_idx * th + g * _ACC_ROWS) < H)
        bacc = bacc + jnp.where(b_valid, bd * bd, 0.0) - hr * hr    # (1, W)

        return acc_w, acc_h, bacc, wcorr, row_last

    zero8w = jnp.zeros((_ACC_ROWS, W), jnp.float32)
    carry = (zero8w, zero8w,
             jnp.zeros((1, W), jnp.float32),
             jnp.zeros((_ACC_ROWS, 1), jnp.float32),
             prev_ref[...])
    if n_groups <= _MAX_UNROLL_GROUPS:
        for g in range(n_groups):        # short static loop: fully unrolled
            carry = body(g, carry)
    else:
        carry = jax.lax.fori_loop(0, n_groups, body, carry)
    acc_w, acc_h, bacc, wcorr, last_row = carry

    # Raw sums of squares only; the two 1/N mean scales are applied once on the host.
    out_ref[0] = out_ref[0] + acc_w - jnp.where(cid == 0, wcorr, 0.0)
    out_ref[1] = out_ref[1] + acc_h + jnp.where(rid8 == 0, bacc, 0.0)
    prev_ref[...] = last_row


def _pick_row_tile(H, bytes_per_row):
    """Largest row tile: multiple of 8, ~_TARGET_STEP_BYTES of input per grid step."""
    max_rows = max(_ACC_ROWS, _TARGET_STEP_BYTES // max(int(bytes_per_row), 1))
    cap = max(_ACC_ROWS, (min(max_rows, H) // _ACC_ROWS) * _ACC_ROWS)
    if H % _ACC_ROWS == 0 and H <= cap:
        return H
    t = cap
    while t >= _ACC_ROWS:                 # prefer an exact divisor: no ragged tail to mask
        if H % t == 0:
            return t
        t -= _ACC_ROWS
    return cap                            # ragged last tile, masked inside the kernel


# Degenerate tiny-image fallback (the kernel streams 8-row strips): plain JAX, same math.
def _pans_jax(y, x_net, srf_from):
    pan = y[:, PAN_CH].astype(jnp.float32)
    if srf_from == "estimate":
        rec = x_net[:, PAN_CH].astype(jnp.float32)
    else:
        srf = jnp.asarray(_srf_weights(srf_from), jnp.float32).reshape(1, N_MS, 1, 1)
        rec = jnp.sum(x_net[:, :N_MS].astype(jnp.float32) * srf, axis=1)
    return pan, rec


def _tv_jax(img):
    w_var = jnp.mean((img[..., :-1] - img[..., 1:]) ** 2)
    h_var = jnp.mean((img[..., :-1, :] - img[..., 1:, :]) ** 2)
    return h_var + w_var


@functools.partial(jax.jit, static_argnames=("srf_from", "row_tile"))
def tv_structural_loss(y, x_net, srf_from="estimate", row_tile=None):
    """TVStructuralLoss.forward(y, x_net)."""
    assert srf_from in ("estimate", "average", "constant")
    B, _, H, W = y.shape
    assert x_net.shape[0] == B and x_net.shape[2:] == (H, W)

    if H < _ACC_ROWS or W < 2:
        pan, rec = _pans_jax(y, x_net, srf_from)
        return _tv_jax(pan - rec)

    if srf_from == "estimate":
        srf = None
        rec_row_bytes = W * jnp.dtype(x_net.dtype).itemsize
    else:
        srf = _srf_weights(srf_from)
        rec_row_bytes = N_MS * W * jnp.dtype(x_net.dtype).itemsize
    pan_row_bytes = W * jnp.dtype(y.dtype).itemsize

    th = row_tile if row_tile is not None else _pick_row_tile(H, pan_row_bytes + rec_row_bytes)
    assert th % _ACC_ROWS == 0 and _ACC_ROWS <= th <= H
    n_h = pl.cdiv(H, th)
    ragged = (H % th) != 0

    kernel = functools.partial(_tv_kernel, srf=srf, th=th, H=H, W=W, ragged=ragged)

    # Squeezed leading dims: the kernel reads exactly the pan plane of y and either the pan
    # plane (estimate) or the N_MS MS planes (SRF modes) of x_net -- no host-side copies.
    pan_spec = pl.BlockSpec((None, None, th, W), lambda b, h: (b, PAN_CH, h, 0))
    if srf is None:
        rec_spec = pl.BlockSpec((None, None, th, W), lambda b, h: (b, PAN_CH, h, 0))
    else:
        rec_spec = pl.BlockSpec((None, N_MS, th, W), lambda b, h: (b, 0, h, 0))

    partials = pl.pallas_call(
        kernel,
        out_shape=jax.ShapeDtypeStruct((B, 2, _ACC_ROWS, W), jnp.float32),
        grid_spec=pltpu.PrefetchScalarGridSpec(
            num_scalar_prefetch=0,
            grid=(B, n_h),
            in_specs=[pan_spec, rec_spec],
            out_specs=pl.BlockSpec((None, 2, _ACC_ROWS, W), lambda b, h: (b, 0, 0, 0)),
            scratch_shapes=[pltpu.VMEM((1, W), jnp.float32)],   # carried last row of prev strip/tile
        ),
        compiler_params=pltpu.CompilerParams(
            dimension_semantics=("parallel", "arbitrary"),
            vmem_limit_bytes=_VMEM_LIMIT_BYTES,
        ),
    )(y, x_net)

    inv_nw = 1.0 / float(B * H * (W - 1))
    inv_nh = 1.0 / float(B * (H - 1) * W)
    return jnp.sum(partials[:, 0]) * inv_nw + jnp.sum(partials[:, 1]) * inv_nh


# --------------------------------------------------------------------------------------
# Demo / correctness check
# --------------------------------------------------------------------------------------
if __name__ == "__main__":
    key = jax.random.PRNGKey(0)
    k_y, k_x, k_y2, k_x2 = jax.random.split(key, 4)

    B, C, W = 2, N_MS + 1, 128

    def ref_loss(yv, xv, srf_from):
        pan = yv[:, PAN_CH:PAN_CH + 1].astype(jnp.float32)
        hrms = xv[:, :N_MS].astype(jnp.float32)
        if srf_from == "average":
            pan_recon = jnp.mean(hrms, axis=1, keepdims=True)
        elif srf_from == "constant":
            srf = jnp.asarray(CONSTANT_SRF, jnp.float32).reshape(1, N_MS, 1, 1)
            pan_recon = jnp.sum(hrms * srf, axis=1, keepdims=True)
        else:
            pan_recon = xv[:, PAN_CH:PAN_CH + 1].astype(jnp.float32)
        img = pan - pan_recon
        w_var = jnp.mean((img[:, :, :, :-1] - img[:, :, :, 1:]) ** 2)
        h_var = jnp.mean((img[:, :, :-1, :] - img[:, :, 1:, :]) ** 2)
        return h_var + w_var

    def check(yv, xv, srf_from, row_tile=None, tag=""):
        got = jax.block_until_ready(
            tv_structural_loss(yv, xv, srf_from=srf_from, row_tile=row_tile))
        want = ref_loss(yv, xv, srf_from)
        assert jnp.allclose(got, want, rtol=1e-3, atol=1e-6), (tag, srf_from, got, want)

    # Single-tile image; all three SRF modes (non-'estimate' modes fuse the SRF sum in-kernel).
    H1 = 16
    y1 = jax.random.uniform(k_y, (B, C, H1, W), jnp.float32)
    x1 = y1 + 0.05 * jax.random.normal(k_x, (B, C, H1, W), jnp.float32)
    for mode in ("estimate", "average", "constant"):
        check(y1, x1, mode, tag="single-tile")

    # Multi-tile: exercises the cross-tile boundary-row carry and per-batch accumulator reset.
    H2 = 32
    y2 = jax.random.uniform(k_y2, (B, C, H2, W), jnp.float32)
    x2 = y2 + 0.05 * jax.random.normal(k_x2, (B, C, H2, W), jnp.float32)
    check(y2, x2, "estimate", row_tile=8, tag="multi-tile")

    # Ragged height (140 has no multiple-of-8 divisor): exercises the padded last tile's
    # row masking and the in-kernel fori_loop strip streaming (17 strips per tile).
    k_y3, k_x3 = jax.random.split(k_x2)
    H3 = 140
    y3 = jax.random.uniform(k_y3, (B, C, H3, W), jnp.float32)
    x3 = y3 + 0.05 * jax.random.normal(k_x3, (B, C, H3, W), jnp.float32)
    check(y3, x3, "estimate", tag="ragged")
    check(y3, x3, "constant", tag="ragged-srf")

    print("KERNEL_OK")
</pallas_src>

<mosaic_0001>
module attributes {stable_mosaic.version = 11 : i64} {
  func.func @_tv_kernel(%arg0: i32, %arg1: i32, %arg2: memref<1x1x16x128xf32, #tpu.memory_space<vmem>>, %arg3: memref<1x1x16x128xf32, #tpu.memory_space<vmem>>, %arg4: memref<1x2x8x128xf32, #tpu.memory_space<vmem>>, %arg5: memref<1x128xf32, #tpu.memory_space<vmem>>) attributes {dimension_semantics = [#tpu.dimension_semantics<parallel>, #tpu.dimension_semantics<arbitrary>], iteration_bounds = array<i64: 2, 1>, scalar_prefetch = 0 : i64, scratch_operands = 1 : i64, tpu.core_type = #tpu.core_type<tc>, window_params = [{transform_indices = @transform_0, window_bounds = array<i64: 1, 1, 16, 128>}, {transform_indices = @transform_1, window_bounds = array<i64: 1, 1, 16, 128>}, {transform_indices = @transform_2, window_bounds = array<i64: 1, 2, 8, 128>}]} {
    %c0_i32 = arith.constant 0 : i32
    %0 = arith.cmpi eq, %arg1, %c0_i32 : i32
    %1 = arith.extui %0 : i1 to i32
    %c0_i32_0 = arith.constant 0 : i32
    %2 = arith.cmpi ne, %1, %c0_i32_0 : i32
    scf.if %2 {
      %cst_47 = arith.constant 0.000000e+00 : f32
      %96 = vector.broadcast %cst_47 : f32 to vector<2x8x128xf32>
      %c0_48 = arith.constant 0 : index
      %c0_49 = arith.constant 0 : index
      %c0_50 = arith.constant 0 : index
      %c0_51 = arith.constant 0 : index
      %97 = vector.load %arg4[%c0_48, %c0_49, %c0_50, %c0_51] : memref<1x2x8x128xf32, #tpu.memory_space<vmem>>, vector<1x2x8x128xf32>
      %98 = vector.shape_cast %97 : vector<1x2x8x128xf32> to vector<2x8x128xf32>
      %99 = vector.shape_cast %96 : vector<2x8x128xf32> to vector<1x2x8x128xf32>
      tpu.vector_store %arg4[%c0_48, %c0_49, %c0_50, %c0_51], %99 {strides = array<i32>} : memref<1x2x8x128xf32, #tpu.memory_space<vmem>>, vector<1x2x8x128xf32>,
      %cst_52 = arith.constant 0.000000e+00 : f32
      %100 = vector.broadcast %cst_52 : f32 to vector<1x128xf32>
      %c0_53 = arith.constant 0 : index
      %c0_54 = arith.constant 0 : index
      %101 = vector.load %arg5[%c0_53, %c0_54] : memref<1x128xf32, #tpu.memory_space<vmem>>, vector<1x128xf32>
      tpu.vector_store %arg5[%c0_53, %c0_54], %100 {strides = array<i32>} : memref<1x128xf32, #tpu.memory_space<vmem>>, vector<1x128xf32>,
    } else {
    }
    %3 = tpu.iota {dimensions = array<i32: 0>} : vector<8x128xi32>
    %4 = tpu.iota {dimensions = array<i32: 1>} : vector<8x128xi32>
    %cst = arith.constant 0.000000e+00 : f32
    %5 = vector.broadcast %cst : f32 to vector<8x128xf32>
    %cst_1 = arith.constant 0.000000e+00 : f32
    %6 = vector.broadcast %cst_1 : f32 to vector<1x128xf32>
    %cst_2 = arith.constant 0.000000e+00 : f32
    %7 = vector.broadcast %cst_2 : f32 to vector<8x1xf32>
    %c0 = arith.constant 0 : index
    %c0_3 = arith.constant 0 : index
    %8 = vector.load %arg5[%c0, %c0_3] : memref<1x128xf32, #tpu.memory_space<vmem>>, vector<1x128xf32>
    %c0_4 = arith.constant 0 : index
    %c0_5 = arith.constant 0 : index
    %c0_6 = arith.constant 0 : index
    %c0_7 = arith.constant 0 : index
    %9 = vector.load %arg2[%c0_4, %c0_5, %c0_6, %c0_7] : memref<1x1x16x128xf32, #tpu.memory_space<vmem>>, vector<1x1x8x128xf32>
    %10 = vector.shape_cast %9 : vector<1x1x8x128xf32> to vector<8x128xf32>
    %c0_8 = arith.constant 0 : index
    %c0_9 = arith.constant 0 : index
    %c0_10 = arith.constant 0 : index
    %c0_11 = arith.constant 0 : index
    %11 = vector.load %arg3[%c0_8, %c0_9, %c0_10, %c0_11] : memref<1x1x16x128xf32, #tpu.memory_space<vmem>>, vector<1x1x8x128xf32>
    %12 = vector.shape_cast %11 : vector<1x1x8x128xf32> to vector<8x128xf32>
    %13 = arith.subf %10, %12 : vector<8x128xf32>
    %c1_i32 = arith.constant 1 : i32
    %14 = tpu.dynamic_rotate %13 by %c1_i32 dim 1 : vector<8x128xf32>, i32 -> vector<8x128xf32>
    %15 = arith.subf %13, %14 : vector<8x128xf32>
    %16 = arith.mulf %15, %15 : vector<8x128xf32>
    %17 = arith.addf %5, %16 : vector<8x128xf32>
    %18 = vector.extract_strided_slice %13 {offsets = [0, 0], sizes = [8, 1], strides = [1, 1]} : vector<8x128xf32> to vector<8x1xf32>
    %19 = vector.extract_strided_slice %13 {offsets = [0, 127], sizes = [8, 1], strides = [1, 1]} : vector<8x128xf32> to vector<8x1xf32>
    %20 = arith.subf %18, %19 : vector<8x1xf32>
    %21 = arith.mulf %20, %20 : vector<8x1xf32>
    %22 = arith.addf %7, %21 : vector<8x1xf32>
    %c1_i32_12 = arith.constant 1 : i32
    %23 = tpu.dynamic_rotate %13 by %c1_i32_12 dim 0 : vector<8x128xf32>, i32 -> vector<8x128xf32>
    %24 = arith.subf %13, %23 : vector<8x128xf32>
    %25 = arith.mulf %24, %24 : vector<8x128xf32>
    %26 = arith.addf %5, %25 : vector<8x128xf32>
    %27 = vector.extract_strided_slice %13 {offsets = [0, 0], sizes = [1, 128], strides = [1, 1]} : vector<8x128xf32> to vector<1x128xf32>
    %28 = vector.extract_strided_slice %13 {offsets = [7, 0], sizes = [1, 128], strides = [1, 1]} : vector<8x128xf32> to vector<1x128xf32>
    %29 = arith.subf %28, %27 : vector<1x128xf32>
    %30 = arith.subf %8, %27 : vector<1x128xf32>
    %c0_i32_13 = arith.constant 0 : i32
    %31 = arith.cmpi sgt, %arg1, %c0_i32_13 : i32
    %false = arith.constant false
    %32 = arith.ori %31, %false : i1
    %33 = arith.mulf %30, %30 : vector<1x128xf32>
    %cst_14 = arith.constant 0.000000e+00 : f32
    %34 = vector.broadcast %cst_14 : f32 to vector<1x128xf32>
    %35 = arith.select %32, %33, %34 : vector<1x128xf32>
    %36 = arith.addf %6, %35 : vector<1x128xf32>
    %37 = arith.mulf %29, %29 : vector<1x128xf32>
    %38 = arith.subf %36, %37 : vector<1x128xf32>
    %c0_15 = arith.constant 0 : index
    %c0_16 = arith.constant 0 : index
    %c8 = arith.constant 8 : index
    %c0_17 = arith.constant 0 : index
    %39 = vector.load %arg2[%c0_15, %c0_16, %c8, %c0_17] : memref<1x1x16x128xf32, #tpu.memory_space<vmem>>, vector<1x1x8x128xf32>
    %40 = vector.shape_cast %39 : vector<1x1x8x128xf32> to vector<8x128xf32>
    %c0_18 = arith.constant 0 : index
    %c0_19 = arith.constant 0 : index
    %c8_20 = arith.constant 8 : index
    %c0_21 = arith.constant 0 : index
    %41 = vector.load %arg3[%c0_18, %c0_19, %c8_20, %c0_21] : memref<1x1x16x128xf32, #tpu.memory_space<vmem>>, vector<1x1x8x128xf32>
    %42 = vector.shape_cast %41 : vector<1x1x8x128xf32> to vector<8x128xf32>
    %43 = arith.subf %40, %42 : vector<8x128xf32>
    %c1_i32_22 = arith.constant 1 : i32
    %44 = tpu.dynamic_rotate %43 by %c1_i32_22 dim 1 : vector<8x128xf32>, i32 -> vector<8x128xf32>
    %45 = arith.subf %43, %44 : vector<8x128xf32>
    %46 = arith.mulf %45, %45 : vector<8x128xf32>
    %47 = arith.addf %17, %46 : vector<8x128xf32>
    %48 = vector.extract_strided_slice %43 {offsets = [0, 0], sizes = [8, 1], strides = [1, 1]} : vector<8x128xf32> to vector<8x1xf32>
    %49 = vector.extract_strided_slice %43 {offsets = [0, 127], sizes = [8, 1], strides = [1, 1]} : vector<8x128xf32> to vector<8x1xf32>
    %50 = arith.subf %48, %49 : vector<8x1xf32>
    %51 = arith.mulf %50, %50 : vector<8x1xf32>
    %52 = arith.addf %22, %51 : vector<8x1xf32>
    %c1_i32_23 = arith.constant 1 : i32
    %53 = tpu.dynamic_rotate %43 by %c1_i32_23 dim 0 : vector<8x128xf32>, i32 -> vector<8x128xf32>
    %54 = arith.subf %43, %53 : vector<8x128xf32>
    %55 = arith.mulf %54, %54 : vector<8x128xf32>
    %56 = arith.addf %26, %55 : vector<8x128xf32>
    %57 = vector.extract_strided_slice %43 {offsets = [0, 0], sizes = [1, 128], strides = [1, 1]} : vector<8x128xf32> to vector<1x128xf32>
    %58 = vector.extract_strided_slice %43 {offsets = [7, 0], sizes = [1, 128], strides = [1, 1]} : vector<8x128xf32> to vector<1x128xf32>
    %59 = arith.subf %58, %57 : vector<1x128xf32>
    %60 = arith.subf %28, %57 : vector<1x128xf32>
    %c0_i32_24 = arith.constant 0 : i32
    %61 = arith.cmpi sgt, %arg1, %c0_i32_24 : i32
    %true = arith.constant true
    %62 = arith.ori %61, %true : i1
    %63 = arith.mulf %60, %60 : vector<1x128xf32>
    %cst_25 = arith.constant 0.000000e+00 : f32
    %64 = vector.broadcast %cst_25 : f32 to vector<1x128xf32>
    %65 = arith.select %62, %63, %64 : vector<1x128xf32>
    %66 = arith.addf %38, %65 : vector<1x128xf32>
    %67 = arith.mulf %59, %59 : vector<1x128xf32>
    %68 = arith.subf %66, %67 : vector<1x128xf32>
    %c0_26 = arith.constant 0 : index
    %c0_27 = arith.constant 0 : index
    %c0_28 = arith.constant 0 : index
    %c0_29 = arith.constant 0 : index
    %69 = vector.load %arg4[%c0_26, %c0_27, %c0_28, %c0_29] : memref<1x2x8x128xf32, #tpu.memory_space<vmem>>, vector<1x1x8x128xf32>
    %70 = vector.shape_cast %69 : vector<1x1x8x128xf32> to vector<8x128xf32>
    %71 = arith.addf %70, %47 : vector<8x128xf32>
    %c0_i32_30 = arith.constant 0 : i32
    %72 = vector.broadcast %c0_i32_30 : i32 to vector<8x128xi32>
    %73 = arith.cmpi eq, %4, %72 : vector<8x128xi32>
    %cst_31 = arith.constant 0.000000e+00 : f32
    %74 = vector.shape_cast %52 : vector<8x1xf32> to vector<8x1xf32>
    %75 = vector.broadcast %74 : vector<8x1xf32> to vector<8x128xf32>
    %76 = vector.broadcast %cst_31 : f32 to vector<8x128xf32>
    %77 = arith.select %73, %75, %76 : vector<8x128xi1>, vector<8x128xf32>
    %78 = arith.subf %71, %77 : vector<8x128xf32>
    %c0_32 = arith.constant 0 : index
    %c0_33 = arith.constant 0 : index
    %c0_34 = arith.constant 0 : index
    %c0_35 = arith.constant 0 : index
    %79 = vector.load %arg4[%c0_32, %c0_33, %c0_34, %c0_35] : memref<1x2x8x128xf32, #tpu.memory_space<vmem>>, vector<1x1x8x128xf32>
    %80 = vector.shape_cast %79 : vector<1x1x8x128xf32> to vector<8x128xf32>
    %81 = vector.shape_cast %78 : vector<8x128xf32> to vector<1x1x8x128xf32>
    tpu.vector_store %arg4[%c0_32, %c0_33, %c0_34, %c0_35], %81 {strides = array<i32>} : memref<1x2x8x128xf32, #tpu.memory_space<vmem>>, vector<1x1x8x128xf32>,
    %c0_36 = arith.constant 0 : index
    %c1 = arith.constant 1 : index
    %c0_37 = arith.constant 0 : index
    %c0_38 = arith.constant 0 : index
    %82 = vector.load %arg4[%c0_36, %c1, %c0_37, %c0_38] : memref<1x2x8x128xf32, #tpu.memory_space<vmem>>, vector<1x1x8x128xf32>
    %83 = vector.shape_cast %82 : vector<1x1x8x128xf32> to vector<8x128xf32>
    %84 = arith.addf %83, %56 : vector<8x128xf32>
    %c0_i32_39 = arith.constant 0 : i32
    %85 = vector.broadcast %c0_i32_39 : i32 to vector<8x128xi32>
    %86 = arith.cmpi eq, %3, %85 : vector<8x128xi32>
    %cst_40 = arith.constant 0.000000e+00 : f32
    %87 = vector.shape_cast %68 : vector<1x128xf32> to vector<1x128xf32>
    %88 = vector.broadcast %87 : vector<1x128xf32> to vector<8x128xf32>
    %89 = vector.broadcast %cst_40 : f32 to vector<8x128xf32>
    %90 = arith.select %86, %88, %89 : vector<8x128xi1>, vector<8x128xf32>
    %91 = arith.addf %84, %90 : vector<8x128xf32>
    %c0_41 = arith.constant 0 : index
    %c1_42 = arith.constant 1 : index
    %c0_43 = arith.constant 0 : index
    %c0_44 = arith.constant 0 : index
    %92 = vector.load %arg4[%c0_41, %c1_42, %c0_43, %c0_44] : memref<1x2x8x128xf32, #tpu.memory_space<vmem>>, vector<1x1x8x128xf32>
    %93 = vector.shape_cast %92 : vector<1x1x8x128xf32> to vector<8x128xf32>
    %94 = vector.shape_cast %91 : vector<8x128xf32> to vector<1x1x8x128xf32>
    tpu.vector_store %arg4[%c0_41, %c1_42, %c0_43, %c0_44], %94 {strides = array<i32>} : memref<1x2x8x128xf32, #tpu.memory_space<vmem>>, vector<1x1x8x128xf32>,
    %c0_45 = arith.constant 0 : index
    %c0_46 = arith.constant 0 : index
    %95 = vector.load %arg5[%c0_45, %c0_46] : memref<1x128xf32, #tpu.memory_space<vmem>>, vector<1x128xf32>
    tpu.vector_store %arg5[%c0_45, %c0_46], %58 {strides = array<i32>} : memref<1x128xf32, #tpu.memory_space<vmem>>, vector<1x128xf32>,
    return
  }
  func.func @transform_0(%arg0: i32, %arg1: i32) -> (i32, i32, i32, i32) {
    %c4_i32 = arith.constant 4 : i32
    %c0_i32 = arith.constant 0 : i32
    %c0_i32_0 = arith.constant 0 : i32
    return %arg0, %c4_i32, %arg1, %c0_i32 : i32, i32, i32, i32
  }
  func.func @transform_1(%arg0: i32, %arg1: i32) -> (i32, i32, i32, i32) {
    %c4_i32 = arith.constant 4 : i32
    %c0_i32 = arith.constant 0 : i32
    %c0_i32_0 = arith.constant 0 : i32
    return %arg0, %c4_i32, %arg1, %c0_i32 : i32, i32, i32, i32
  }
  func.func @transform_2(%arg0: i32, %arg1: i32) -> (i32, i32, i32, i32) {
    %c0_i32 = arith.constant 0 : i32
    %c0_i32_0 = arith.constant 0 : i32
    %c0_i32_1 = arith.constant 0 : i32
    %c0_i32_2 = arith.constant 0 : i32
    return %arg0, %c0_i32, %c0_i32_0, %c0_i32_1 : i32, i32, i32, i32
  }
}

</mosaic_0001>

<llo_original>
// kernel: tv_structural_loss.1
$region0: #{tv_structural_loss.1}
  #allocation0 [shape = 'u32[]', space=smem, size = 0x4, offset = 0x4, fixed_abs, tag = 'smem constant byte address 0x4 - core index']
  #allocation1 [shape = 'u32[144,128]{1,0:T(1,128)}', space=vmem, size = 0x12000, scoped, tag = 'internal scratch']
  #allocation2 [shape = 'f32[1,128]{1,0:T(1,128)}', space=vmem, size = 0x200, scoped, tag = 'scratch operand']
  %s0 = inlined_call_operand.hbm [shape: f32[2,5,16,128], index: 0, kind: input, shape index: {}]
  %s1 = inlined_call_operand.hbm [shape: f32[2,5,16,128], index: 1, kind: input, shape index: {}]
  %s2 = inlined_call_operand.vmem [shape: f32[2,2,8,128], index: 2, kind: output, shape index: {}]
  %s3 = sld [smem:[#allocation0]]
  $region53: #{tv_structural_loss.1} parent=0
    _
  %s5 = ssub.s32 1, %s3
  %s6 = scalar_select 0, %s5, %s3
  $region1: #{tv_structural_loss.1} parent=0
    #allocation3 [shape = 'u8[16384]{0}', space=vmem, size = 0x4000, scoped, tag = 'input window, operand 0']
    #allocation4 [shape = 's32[2]{0}', space=sflag, size = 0x8, scoped, tag = 'scoped memory for tv_structural_loss.1']
    #allocation5 [shape = 'u8[16384]{0}', space=vmem, size = 0x4000, scoped, tag = 'input window, operand 1']
    #allocation6 [shape = 's32[2]{0}', space=sflag, size = 0x8, scoped, tag = 'scoped memory for tv_structural_loss.1']
    %7 = vsyncpa [#allocation4], 0
    %s8 = scalar_lea.sflag [#allocation4], 1
    %9 = vsyncpa %s8, 0
    %10 = vsyncpa [#allocation6], 0
    %s11 = scalar_lea.sflag [#allocation6], 1
    %12 = vsyncpa %s11, 0
    loop: start=0, step=1, limit=4
    $region2: #{tv_structural_loss.1} parent=1 // loop_pre_header
      _
    $region3: #{tv_structural_loss.1} parent=1 // loop_header
      %s14 = sphi 0, %s18
      %p15 = scmp.ge.s32.totalorder %s14, 4
      %s21 = sphi 0, %s33
      %s22 = sphi 0, %s29
      %s23 = sphi 0, %s21
      %s24 = sphi 0, %s22
      %s25 = sphi 0, %s23
      %s26 = sphi 0, %s24
      %s38 = sphi 0, %s40
      %s41 = sphi 0, %s38
      %s42 = sphi 0, %s41
      %s58 = sphi 0, %s42
      %s66 = sphi 0, %s68
      %s69 = sphi 0, %s66
      %s70 = sphi 0, %s69
      %s86 = sphi 0, %s70
      %s92 = sphi 0, %s94
      %s95 = sphi 0, %s92
      %s96 = sphi 0, %s95
      %s112 = sphi 0, %s96
    $region4: #{tv_structural_loss.1} parent=1 // loop_header_branch
      %17 = sbr.rel (%p15) target = $region8
    $region5: #{tv_structural_loss.1} parent=1 // loop_body
      %s19 = ssub.s32 %s14, 1
      %s20 = ssub.s32 %s14, 2
      %s27 = sadd.s32 1, %s22
      %p28 = scmp.ge.s32.totalorder %s27, 1
      %s29 = scalar_select %p28, 0, %s27
      %s30 = sadd.s32 1, %s21
      %s31 = scalar_select %p28, %s30, %s21
      %p32 = scmp.ge.s32.totalorder %s31, 2
      %s33 = scalar_select %p32, 0, %s31
      %s34 = ssub.s32 %s21, %s33
      %s35 = ssub.s32 %s22, %s29
      %s36 = sor.u32 %s34, %s35
      %p37 = scmp.eq.s32.totalorder %s36, 0
      %s39 = sadd.s32 %s38, 1
      %s40 = scalar_select %p37, %s38, %s39
      %p43 = pneg %p37
      %p44 = scmp.eq.s32.totalorder %s14, 1
      %p45 = por %p43, %p44
      %p46 = scmp.ne.s32.totalorder %s38, %s41
      %p47 = scmp.eq.s32.totalorder %s14, 0
      %p48 = por %p46, %p47
      %p49 = scmp.ne.s32.totalorder %s38, %s41
      %p50 = scmp.eq.s32.totalorder %s19, 1
      %p51 = por %p49, %p50
      %p52 = scmp.ne.s32.totalorder %s41, %s42
      %p53 = scmp.eq.s32.totalorder %s19, 0
      %p54 = por %p52, %p53
      %p55 = scmp.ne.s32.totalorder %s41, %s42
      %p56 = scmp.eq.s32.totalorder %s20, 1
      %p57 = por %p55, %p56
      %p59 = scmp.ne.s32.totalorder %s42, %s58
      %p60 = scmp.eq.s32.totalorder %s20, 0
      %p61 = por %p59, %p60
      %s62 = ssub.s32 %s21, %s33
      %s63 = ssub.s32 %s22, %s29
      %s64 = sor.u32 %s62, %s63
      %p65 = scmp.eq.s32.totalorder %s64, 0
      %s67 = sadd.s32 %s66, 1
      %s68 = scalar_select %p65, %s66, %s67
      %p71 = pneg %p65
      %p72 = scmp.eq.s32.totalorder %s14, 1
      %p73 = por %p71, %p72
      %p74 = scmp.ne.s32.totalorder %s66, %s69
      %p75 = scmp.eq.s32.totalorder %s14, 0
      %p76 = por %p74, %p75
      %p77 = scmp.ne.s32.totalorder %s66, %s69
      %p78 = scmp.eq.s32.totalorder %s19, 1
      %p79 = por %p77, %p78
      %p80 = scmp.ne.s32.totalorder %s69, %s70
      %p81 = scmp.eq.s32.totalorder %s19, 0
      %p82 = por %p80, %p81
      %p83 = scmp.ne.s32.totalorder %s69, %s70
      %p84 = scmp.eq.s32.totalorder %s20, 1
      %p85 = por %p83, %p84
      %p87 = scmp.ne.s32.totalorder %s70, %s86
      %p88 = scmp.eq.s32.totalorder %s20, 0
      %p89 = por %p87, %p88
      %s90 = ssub.s32 %s21, %s33
      %p91 = scmp.eq.s32.totalorder %s90, 0
      %s93 = sadd.s32 %s92, 1
      %s94 = scalar_select %p91, %s92, %s93
      %p97 = pneg %p91
      %p98 = scmp.eq.s32.totalorder %s14, 1
      %p99 = por %p97, %p98
      %p100 = scmp.ne.s32.totalorder %s92, %s95
      %p101 = scmp.eq.s32.totalorder %s14, 0
      %p102 = por %p100, %p101
      %p103 = scmp.ne.s32.totalorder %s92, %s95
      %p104 = scmp.eq.s32.totalorder %s19, 1
      %p105 = por %p103, %p104
      %p106 = scmp.ne.s32.totalorder %s95, %s96
      %p107 = scmp.eq.s32.totalorder %s19, 0
      %p108 = por %p106, %p107
      %p109 = scmp.ne.s32.totalorder %s95, %s96
      %p110 = scmp.eq.s32.totalorder %s20, 1
      %p111 = por %p109, %p110
      %p113 = scmp.ne.s32.totalorder %s96, %s112
      %p114 = scmp.eq.s32.totalorder %s20, 0
      %p115 = por %p113, %p114
      %p116 = scmp.le.s32.totalorder 1, %s14
      %p117 = scmp.lt.s32.totalorder %s14, 3
      %p118 = pnand %p116, %p117
      %p119 = pneg %p118
      // Predicated region
      $region9: #{tv_structural_loss.1} parent=5 // pred_check
        _
      $region10: #{tv_structural_loss.1} parent=5 // pred_check_branch
        %121 = sbr.rel (%p118) target = $region12
      $region11: #{tv_structural_loss.1} parent=5 // pred_region
        %s122 = ssub.s32 %s14, 1
      $region12: #{tv_structural_loss.1} parent=5 // pred_fallthru
        _
      %p123 = scmp.lt.s32.totalorder %s14, 2
      // Predicated region
      $region13: #{tv_structural_loss.1} parent=5 // pred_check
        %p124 = pneg %p123
      $region14: #{tv_structural_loss.1} parent=5 // pred_check_branch
        %126 = sbr.rel (%p124) target = $region16
      $region15: #{tv_structural_loss.1} parent=5 // pred_region
        // Predicated region
        $region17: #{tv_structural_loss.1} parent=15 // pred_check
          %p127 = pneg %p48
        $region18: #{tv_structural_loss.1} parent=15 // pred_check_branch
          %129 = sbr.rel (%p127) target = $region20
        $region19: #{tv_structural_loss.1} parent=15 // pred_region
          %s130 = sand.u32 %s38, 1
          %s131 = scalar_lea.sflag [#allocation4], %s130
          %s132 = sand.u32 %s38, 1
          %s133 = smul.addr %s132, 16
          %s134 = scalar_lea.vmem [#allocation3], %s133
          %s135 = smul.u32 2, %s22
          %s137 = ssub.s32 256, 256
          %138 = vsyncadd %s131, %s137
          %s139 = sadd.s32 %s135, 8
          %s140 = smul.addr %s21, 10
          %s141 = sadd.s32 %s139, %s140
          %s142 = smul.addr %s141, 128
          %s143 = scalar_lea.hbm %s0, %s142
          %s144 = sshll.u32 %s134, 4
          %s145 = int_to_ptr.vmem [resolvable:$true] %s144
          %150 = dma.hbm_to_vmem [thread:$0]  %s143, 256, %s145, %s131, 128, 128, 8
        $region20: #{tv_structural_loss.1} parent=15 // pred_fallthru
          _
        // Predicated region
        $region21: #{tv_structural_loss.1} parent=15 // pred_check
          %p151 = pneg %p76
        $region22: #{tv_structural_loss.1} parent=15 // pred_check_branch
          %153 = sbr.rel (%p151) target = $region24
        $region23: #{tv_structural_loss.1} parent=15 // pred_region
          %s154 = sand.u32 %s66, 1
          %s155 = scalar_lea.sflag [#allocation6], %s154
          %s156 = sand.u32 %s66, 1
          %s157 = smul.addr %s156, 16
          %s158 = scalar_lea.vmem [#allocation5], %s157
          %s159 = smul.u32 2, %s22
          %s161 = ssub.s32 256, 256
          %162 = vsyncadd %s155, %s161
          %s163 = sadd.s32 %s159, 8
          %s164 = smul.addr %s21, 10
          %s165 = sadd.s32 %s163, %s164
          %s166 = smul.addr %s165, 128
          %s167 = scalar_lea.hbm %s1, %s166
          %s168 = sshll.u32 %s158, 4
          %s169 = int_to_ptr.vmem [resolvable:$true] %s168
          %174 = dma.hbm_to_vmem [thread:$0]  %s167, 256, %s169, %s155, 128, 128, 8
        $region24: #{tv_structural_loss.1} parent=15 // pred_fallthru
          _
      $region16: #{tv_structural_loss.1} parent=5 // pred_fallthru
        _
      %p175 = scmp.le.s32.totalorder 1, %s14
      %p176 = scmp.lt.s32.totalorder %s14, 3
      %p177 = pnand %p175, %p176
      %p178 = pneg %p177
      // Predicated region
      $region25: #{tv_structural_loss.1} parent=5 // pred_check
        _
      $region26: #{tv_structural_loss.1} parent=5 // pred_check_branch
        %180 = sbr.rel (%p177) target = $region28
      $region27: #{tv_structural_loss.1} parent=5 // pred_region
        %s181 = ssub.s32 %s14, 1
        %s182 = sand.u32 %s41, 1
        %s183 = scalar_lea.sflag [#allocation4], %s182
        %s184 = sand.u32 %s41, 1
        %s185 = smul.addr %s184, 16
        %s186 = scalar_lea.vmem [#allocation3], %s185
        // Predicated region
        $region29: #{tv_structural_loss.1} parent=27 // pred_check
          %p187 = pneg %p54
        $region30: #{tv_structural_loss.1} parent=27 // pred_check_branch
          %189 = sbr.rel (%p187) target = $region32
        $region31: #{tv_structural_loss.1} parent=27 // pred_region
          %190 = dma.done %s183, 256
        $region32: #{tv_structural_loss.1} parent=27 // pred_fallthru
          _
        %s191 = sand.u32 %s69, 1
        %s192 = scalar_lea.sflag [#allocation6], %s191
        %s193 = sand.u32 %s69, 1
        %s194 = smul.addr %s193, 16
        %s195 = scalar_lea.vmem [#allocation5], %s194
        // Predicated region
        $region33: #{tv_structural_loss.1} parent=27 // pred_check
          %p196 = pneg %p82
        $region34: #{tv_structural_loss.1} parent=27 // pred_check_branch
          %198 = sbr.rel (%p196) target = $region36
        $region35: #{tv_structural_loss.1} parent=27 // pred_region
          %199 = dma.done %s192, 256
        $region36: #{tv_structural_loss.1} parent=27 // pred_fallthru
          _
        %s200 = sand.u32 %s41, 1
        %s201 = scalar_lea.sflag [#allocation4], %s200
        %s202 = sand.u32 %s41, 1
        %s203 = smul.addr %s202, 16
        %s204 = scalar_lea.vmem [#allocation3], %s203
        %p205 = pneg %p54
        %p206 = pneg %p51
        %s207 = sand.u32 %s69, 1
        %s208 = scalar_lea.sflag [#allocation6], %s207
        %s209 = sand.u32 %s69, 1
        %s210 = smul.addr %s209, 16
        %s211 = scalar_lea.vmem [#allocation5], %s210
        %p212 = pneg %p82
        %p213 = pneg %p79
        %p214 = pneg %p108
        %p215 = pneg %p105
        %p216 = scmp.lt.s32.totalorder %s23, 1
        %s217 = scalar_select %p216, %s23, 1
        %s218 = smul.addr %s217, 2
        %s219 = smul.addr %s218, 8
        %s220 = scalar_lea.vmem %s2, %s219
        %s221 = smul.u32 2, %s24
        %s222 = smul.u32 2, %s24
        %p223 = scmp.lt.s32.totalorder %s23, 1
        %s224 = scalar_select %p223, %s23, 1
        %s225 = smul.addr %s224, 2
        %s226 = smul.addr %s225, 8
        %s227 = scalar_lea.vmem %s2, %s226
        %p228 = scmp.eq.s32.totalorder %s24, 0
        // Predicated region
        $region37: #{tv_structural_loss.1} parent=27 // pred_check
          %p229 = pneg %p228
        $region38: #{tv_structural_loss.1} parent=27 // pred_check_branch
          %231 = sbr.rel (%p229) target = $region40
        $region39: #{tv_structural_loss.1} parent=27 // pred_region
          %232 = vst [vmem:[%s227] sm:$0xff] 0.0
          %233 = vst [vmem:[%s227 + $0x8] sm:$0xff] 0.0
          %234 = vst [vmem:[#allocation2] sm:$0x1] 0.0
        $region40: #{tv_structural_loss.1} parent=27 // pred_fallthru
          _
        %v235 = vlaneseq
        %v236 = vshrl.u32 %v235, 7
        %v237 = vlaneseq
        %v238 = vand.u32 %v237, 127
        %v239 = vld [vmem:[#allocation2] sm:$0x1]
        %v240 = vld [vmem:[%s186] sm:$0xff]
        %v241 = vld [vmem:[%s195] sm:$0xff]
        %v242 = vsub.f32 %v240, %v241
        %243 = vrot.lane.b32.xlu0 %v242, 1
        %v244 = vpop.permute.xlu0 %243
        %v245 = vsub.f32 %v242, %v244
        %v246 = vmul.f32 %v245, %v245
        %v247 = vadd.f32 %v246, 0.0
        %249 = vrot.lane.b32.xlu0 %v242, 1
        %v250 = vpop.permute.xlu0 %249
        %v252 = vsub.f32 %v242, %v250
        %v253 = vmul.f32 %v252, %v252
        %v254 = vadd.f32 %v253, 0.0
        %v255 = vrot.slane %v242, 7
        %v256 = vsub.f32 %v242, %v255
        %v257 = vmul.f32 %v256, %v256
        %v258 = vadd.f32 %v257, 0.0
        %v259 = vrot.slane %v242, 1
        %v261 = vsub.f32 %v242, %v259
        %v262 = vsub.f32 %v239, %v242
        %p263 = scmp.gt.s32.totalorder %s24, 0
        %v264 = vmul.f32 %v262, %v262
        %s265 = scalar_select %p263, 1, 0
        %v266 = vstv %s265
        %vm267 = vcmp.eq.s32.totalorder %v266, 1
        %v268 = vsel %vm267, %v264, 0.0
        %v269 = vadd.f32 %v268, 0.0
        %v270 = vmul.f32 %v261, %v261
        %v272 = vcombine.high %v270, %v270
        %v274 = vunpack.c.l.s4 1966171168
        %v275 = vunpack.c.0.s8 %v274
        %v276 = vlaneseq
        %v277 = vshrl.u32 %v276, 7
        %v278 = vsub.s32 %v275, %v277
        %v279 = vrot.slane %v272, %v278
        %v280 = vcombine.high %v279, %v279
        %v282 = vunpack.c.l.s4 1966171168
        %v283 = vunpack.c.0.s8 %v282
        %v284 = vlaneseq
        %v285 = vshrl.u32 %v284, 7
        %v286 = vsub.s32 %v283, %v285
        %v287 = vrot.slane %v280, %v286
        %v288 = vcombine.high %v287, %v287
        %v290 = vsub.f32 %v269, %v288
        %v291 = vld [vmem:[%s186 + $0x8] sm:$0xff]
        %v292 = vld [vmem:[%s195 + $0x8] sm:$0xff]
        %v293 = vsub.f32 %v291, %v292
        %294 = vrot.lane.b32.xlu0 %v293, 1
        %v295 = vpop.permute.xlu0 %294
        %v296 = vsub.f32 %v293, %v295
        %v297 = vmul.f32 %v296, %v296
        %v298 = vadd.f32 %v247, %v297
        %300 = vrot.lane.b32.xlu0 %v293, 1
        %v301 = vpop.permute.xlu0 %300
        %v303 = vsub.f32 %v293, %v301
        %v304 = vmul.f32 %v303, %v303
        %v305 = vadd.f32 %v254, %v304
        %v306 = vrot.slane %v293, 7
        %v307 = vsub.f32 %v293, %v306
        %v308 = vmul.f32 %v307, %v307
        %v309 = vadd.f32 %v258, %v308
        %v310 = vrot.slane %v293, 1
        %v312 = vsub.f32 %v293, %v310
        %v313 = vsub.f32 %v242, %v310
        %v314 = vmul.f32 %v313, %v313
        %v316 = vcombine.high %v314, %v314
        %v318 = vunpack.c.l.s4 1966171168
        %v319 = vunpack.c.0.s8 %v318
        %v320 = vlaneseq
        %v321 = vshrl.u32 %v320, 7
        %v322 = vsub.s32 %v319, %v321
        %v323 = vrot.slane %v316, %v322
        %v324 = vcombine.high %v323, %v323
        %v326 = vunpack.c.l.s4 1966171168
        %v327 = vunpack.c.0.s8 %v326
        %v328 = vlaneseq
        %v329 = vshrl.u32 %v328, 7
        %v330 = vsub.s32 %v327, %v329
        %v331 = vrot.slane %v324, %v330
        %v332 = vcombine.high %v331, %v331
        %v334 = vadd.f32 %v290, %v332
        %v335 = vmul.f32 %v312, %v312
        %v337 = vcombine.high %v335, %v335
        %v339 = vunpack.c.l.s4 1966171168
        %v340 = vunpack.c.0.s8 %v339
        %v341 = vlaneseq
        %v342 = vshrl.u32 %v341, 7
        %v343 = vsub.s32 %v340, %v342
        %v344 = vrot.slane %v337, %v343
        %v345 = vcombine.high %v344, %v344
        %v347 = vunpack.c.l.s4 1966171168
        %v348 = vunpack.c.0.s8 %v347
        %v349 = vlaneseq
        %v350 = vshrl.u32 %v349, 7
        %v351 = vsub.s32 %v348, %v350
        %v352 = vrot.slane %v345, %v351
        %v353 = vcombine.high %v352, %v352
        %v355 = vsub.f32 %v334, %v353
        %v356 = vld [vmem:[%s227] sm:$0xff]
        %v357 = vadd.f32 %v356, %v298
        %vm358 = vcmp.eq.s32.totalorder %v238, 0
        %360 = vset.pattern.permute.xlu0 0
        %361 = vperm.xlu0 %360, %v305
        %v362 = vpop.permute.xlu0 %361
        %v364 = vsel %vm358, %v362, 0.0
        %v365 = vsub.f32 %v357, %v364
        %366 = vst [vmem:[%s227] sm:$0xff] %v365
        %s367 = scalar_lea.vmem %s227, 8
        %v368 = vld [vmem:[%s367] sm:$0xff]
        %v369 = vadd.f32 %v368, %v309
        %vm370 = vcmp.eq.s32.totalorder %v236, 0
        %v372 = vlaneseq
        %v373 = vshrl.u32 %v372, 7
        %v374 = vsub.s32 0, %v373
        %v375 = vrot.slane %v355, %v374
        %v377 = vsel %vm370, %v375, 0.0
        %v378 = vadd.f32 %v369, %v377
        %379 = vst [vmem:[%s367] sm:$0xff] %v378
        %380 = vst [vmem:[#allocation2 - $0x7] sm:$0x80] %v293
        %p381 = scmp.lt.s32.totalorder %s23, 1
        %s382 = scalar_select %p381, %s23, 1
        %s383 = smul.addr %s382, 2
        %s384 = smul.addr %s383, 8
        %s385 = scalar_lea.vmem %s2, %s384
        // Predicated region
        $region41: #{tv_structural_loss.1} parent=27 // pred_check
          %p386 = pneg %p105
        $region42: #{tv_structural_loss.1} parent=27 // pred_check_branch
          %388 = sbr.rel (%p386) target = $region44
        $region43: #{tv_structural_loss.1} parent=27 // pred_region
          _
        $region44: #{tv_structural_loss.1} parent=27 // pred_fallthru
          _
      $region28: #{tv_structural_loss.1} parent=5 // pred_fallthru
        _
      %p389 = scmp.le.s32.totalorder 2, %s14
      // Predicated region
      $region45: #{tv_structural_loss.1} parent=5 // pred_check
        %p390 = pneg %p389
      $region46: #{tv_structural_loss.1} parent=5 // pred_check_branch
        %392 = sbr.rel (%p390) target = $region48
      $region47: #{tv_structural_loss.1} parent=5 // pred_region
        %s393 = ssub.s32 %s14, 2
        // Predicated region
        $region49: #{tv_structural_loss.1} parent=47 // pred_check
          %p394 = pneg %p111
        $region50: #{tv_structural_loss.1} parent=47 // pred_check_branch
          %396 = sbr.rel (%p394) target = $region52
        $region51: #{tv_structural_loss.1} parent=47 // pred_region
          %p397 = scmp.lt.s32.totalorder %s25, 1
          %s398 = scalar_select %p397, %s25, 1
          %s399 = smul.addr %s398, 2
          %s400 = smul.addr %s399, 8
          %s401 = scalar_lea.vmem %s2, %s400
        $region52: #{tv_structural_loss.1} parent=47 // pred_fallthru
          _
      $region48: #{tv_structural_loss.1} parent=5 // pred_fallthru
        _
    $region6: #{tv_structural_loss.1} parent=1 // loop_footer
      %s18 = sadd.s32 1, %s14
    $region7: #{tv_structural_loss.1} parent=1 // loop_footer_branch
      %13 = sbr.rel target = $region3
    $region8: #{tv_structural_loss.1} parent=1 // loop_exit
      _
    %402 = vsyncpa [#allocation4], 1
    %s403 = scalar_lea.sflag [#allocation4], 1
    %404 = vsyncpa %s403, 1
    %405 = vsyncpa [#allocation6], 1
    %s406 = scalar_lea.sflag [#allocation6], 1
    %407 = vsyncpa %s406, 1

</llo_original>
